<compile_context>
chip_gen: v5e
topology: v5e:2x2
jax: 0.10.0
libtpu: 0.0.40
codegen_flags: <defaults>
</compile_context>

<pallas_src>
import jax
import jax.numpy as jnp
from jax.experimental import pallas as pl
from jax.experimental.pallas import tpu as pltpu

IN_F, HID, OUT_F = 6, 271, 6          # logical sizes (PyTorch module)
K_PAD, H_PAD, O_PAD = 16, 384, 128    # padded sizes (lane/sublane aligned)


# ----------------------------------------------------------------------------
# Pallas kernel: fc1 -> ReLU -> fc2 -> ReLU -> fc3 -> ReLU -> fc4, fully in VMEM
# ----------------------------------------------------------------------------
def _mlp4_kernel(x_ref, w1_ref, b1_ref, w2_ref, b2_ref, w3_ref, b3_ref,
                 w4_ref, b4_ref, o_ref):
    # bf16 MXU matmuls with f32 accumulation; bias-add / ReLU in f32.
    x = x_ref[...].astype(jnp.bfloat16)
    h = jnp.dot(x, w1_ref[...],
                preferred_element_type=jnp.float32) + b1_ref[...]
    h = jnp.maximum(h, 0.0)
    h = jnp.dot(h.astype(jnp.bfloat16), w2_ref[...],
                preferred_element_type=jnp.float32) + b2_ref[...]
    h = jnp.maximum(h, 0.0)
    h = jnp.dot(h.astype(jnp.bfloat16), w3_ref[...],
                preferred_element_type=jnp.float32) + b3_ref[...]
    h = jnp.maximum(h, 0.0)
    o_ref[...] = jnp.dot(h.astype(jnp.bfloat16), w4_ref[...],
                         preferred_element_type=jnp.float32) + b4_ref[...]


# ----------------------------------------------------------------------------
# Param handling
# ----------------------------------------------------------------------------
def init_params(key):
    """PyTorch-style Linear params: weight (out, in), bias (out,)."""
    def linear(k, fan_in, fan_out):
        kw, kb = jax.random.split(k)
        bound = 1.0 / jnp.sqrt(jnp.float32(fan_in))
        w = jax.random.uniform(kw, (fan_out, fan_in), jnp.float32, -bound, bound)
        b = jax.random.uniform(kb, (fan_out,), jnp.float32, -bound, bound)
        return w, b

    k1, k2, k3, k4 = jax.random.split(key, 4)
    w1, b1 = linear(k1, IN_F, HID)
    w2, b2 = linear(k2, HID, HID)
    w3, b3 = linear(k3, HID, HID)
    w4, b4 = linear(k4, HID, OUT_F)
    return {"w1": w1, "b1": b1, "w2": w2, "b2": b2,
            "w3": w3, "b3": b3, "w4": w4, "b4": b4}


def prepare_padded_params(params):
    """One-time prep: transpose to (in, out), zero-pad, weights -> bf16."""
    def pad_w(w_torch, rows, cols):  # (out, in) -> padded bf16 (rows, cols)
        wt = w_torch.T.astype(jnp.float32)
        wp = jnp.zeros((rows, cols), jnp.float32).at[:wt.shape[0],
                                                     :wt.shape[1]].set(wt)
        return wp.astype(jnp.bfloat16)

    def pad_b(b, cols):              # bias stays f32 (added post-matmul)
        return jnp.zeros((1, cols), jnp.float32).at[0, :b.shape[0]].set(
            b.astype(jnp.float32))

    return {
        "w1": pad_w(params["w1"], K_PAD, H_PAD), "b1": pad_b(params["b1"], H_PAD),
        "w2": pad_w(params["w2"], H_PAD, H_PAD), "b2": pad_b(params["b2"], H_PAD),
        "w3": pad_w(params["w3"], H_PAD, H_PAD), "b3": pad_b(params["b3"], H_PAD),
        "w4": pad_w(params["w4"], H_PAD, O_PAD), "b4": pad_b(params["b4"], O_PAD),
    }


# ----------------------------------------------------------------------------
# Forward wrapper
# ----------------------------------------------------------------------------
def _round_up(x, m):
    return (x + m - 1) // m * m


def mlp_forward(x, padded_params, *, max_block_rows=1024):
    """x: (B, 6) float32 -> (B, 6) float32."""
    B = x.shape[0]
    Bp = _round_up(B, 8)                 # pad batch only to a sublane multiple
    tm = min(Bp, max_block_rows)
    # v7x megacore: give the "parallel" batch axis >= 2 grid steps when the
    # batch is big enough so both TensorCores get work.
    if Bp > 8 and pl.cdiv(Bp, tm) < 2:
        tm = max(8, _round_up(pl.cdiv(Bp, 2), 8))
    grid = (pl.cdiv(Bp, tm),)            # last tile may be ragged; that's fine

    # Exact zero feature-column padding; trailing (ragged) rows are sliced off.
    xp = jnp.zeros((Bp, K_PAD), jnp.float32).at[:B, :IN_F].set(
        x.astype(jnp.float32))

    p = padded_params

    def rep(shape):  # weight/bias block: full array, resident across batch tiles
        return pl.BlockSpec(shape, lambda i: (0, 0))

    flops = 2 * B * (IN_F * HID + HID * HID + HID * HID + HID * OUT_F)
    bytes_accessed = (
        4 * B * (IN_F + OUT_F)                                    # x + out (f32)
        + 2 * (IN_F * HID + 2 * HID * HID + HID * OUT_F)          # bf16 weights
        + 4 * (3 * HID + OUT_F))                                  # f32 biases
    cost = pl.CostEstimate(flops=flops, transcendentals=0,
                           bytes_accessed=bytes_accessed)

    out = pl.pallas_call(
        _mlp4_kernel,
        out_shape=jax.ShapeDtypeStruct((Bp, O_PAD), jnp.float32),
        grid_spec=pltpu.PrefetchScalarGridSpec(
            num_scalar_prefetch=0,
            grid=grid,
            in_specs=[
                pl.BlockSpec((tm, K_PAD), lambda i: (i, 0)),
                rep((K_PAD, H_PAD)), rep((1, H_PAD)),
                rep((H_PAD, H_PAD)), rep((1, H_PAD)),
                rep((H_PAD, H_PAD)), rep((1, H_PAD)),
                rep((H_PAD, O_PAD)), rep((1, O_PAD)),
            ],
            out_specs=pl.BlockSpec((tm, O_PAD), lambda i: (i, 0)),
        ),
        compiler_params=pltpu.CompilerParams(
            dimension_semantics=("parallel",)),
        cost_estimate=cost,
    )(xp, p["w1"], p["b1"], p["w2"], p["b2"], p["w3"], p["b3"], p["w4"], p["b4"])

    return out[:B, :OUT_F]


def mlp_reference(x, params):
    """Pure-JAX f32 reference with the exact PyTorch semantics."""
    h = jnp.maximum(x @ params["w1"].T + params["b1"], 0.0)
    h = jnp.maximum(h @ params["w2"].T + params["b2"], 0.0)
    h = jnp.maximum(h @ params["w3"].T + params["b3"], 0.0)
    return h @ params["w4"].T + params["b4"]


if __name__ == "__main__":
    key = jax.random.PRNGKey(0)
    k_params, k_x = jax.random.split(key)

    params = init_params(k_params)
    padded = prepare_padded_params(params)

    B = 2
    x = jax.random.normal(k_x, (B, IN_F), dtype=jnp.float32)

    out = jax.jit(mlp_forward)(x, padded)
    out = jax.block_until_ready(out)

    assert out.shape == (B, OUT_F), out.shape
    assert out.dtype == jnp.float32
    assert bool(jnp.all(jnp.isfinite(out)))

    ref = mlp_reference(x, params)
    # Tolerance accounts for bf16 MXU matmuls (f32 accumulation) vs f32 ref.
    assert bool(jnp.allclose(out, ref, atol=2e-2, rtol=2e-2)), (
        float(jnp.max(jnp.abs(out - ref))))

    print("KERNEL_OK")
</pallas_src>

<mosaic_0001>
module attributes {stable_mosaic.version = 11 : i64} {
  func.func @_mlp4_kernel(%arg0: i32, %arg1: memref<8x16xf32, #tpu.memory_space<vmem>>, %arg2: memref<16x384xbf16, #tpu.memory_space<vmem>>, %arg3: memref<1x384xf32, #tpu.memory_space<vmem>>, %arg4: memref<384x384xbf16, #tpu.memory_space<vmem>>, %arg5: memref<1x384xf32, #tpu.memory_space<vmem>>, %arg6: memref<384x384xbf16, #tpu.memory_space<vmem>>, %arg7: memref<1x384xf32, #tpu.memory_space<vmem>>, %arg8: memref<384x128xbf16, #tpu.memory_space<vmem>>, %arg9: memref<1x128xf32, #tpu.memory_space<vmem>>, %arg10: memref<8x128xf32, #tpu.memory_space<vmem>>) attributes {dimension_semantics = [#tpu.dimension_semantics<parallel>], iteration_bounds = array<i64: 1>, scalar_prefetch = 0 : i64, scratch_operands = 0 : i64, tpu.core_type = #tpu.core_type<tc>, window_params = [{transform_indices = @transform_0, window_bounds = array<i64: 8, 16>}, {pipeline_mode = #tpu.pipeline_mode<synchronous>, transform_indices = @transform_1, window_bounds = array<i64: 16, 384>}, {pipeline_mode = #tpu.pipeline_mode<synchronous>, transform_indices = @transform_2, window_bounds = array<i64: 1, 384>}, {pipeline_mode = #tpu.pipeline_mode<synchronous>, transform_indices = @transform_3, window_bounds = array<i64: 384, 384>}, {pipeline_mode = #tpu.pipeline_mode<synchronous>, transform_indices = @transform_4, window_bounds = array<i64: 1, 384>}, {pipeline_mode = #tpu.pipeline_mode<synchronous>, transform_indices = @transform_5, window_bounds = array<i64: 384, 384>}, {pipeline_mode = #tpu.pipeline_mode<synchronous>, transform_indices = @transform_6, window_bounds = array<i64: 1, 384>}, {pipeline_mode = #tpu.pipeline_mode<synchronous>, transform_indices = @transform_7, window_bounds = array<i64: 384, 128>}, {pipeline_mode = #tpu.pipeline_mode<synchronous>, transform_indices = @transform_8, window_bounds = array<i64: 1, 128>}, {transform_indices = @transform_9, window_bounds = array<i64: 8, 128>}]} {
    %c0 = arith.constant 0 : index
    %c0_0 = arith.constant 0 : index
    %0 = vector.load %arg1[%c0, %c0_0] : memref<8x16xf32, #tpu.memory_space<vmem>>, vector<8x16xf32>
    %1 = arith.truncf %0 : vector<8x16xf32> to vector<8x16xbf16>
    %c0_1 = arith.constant 0 : index
    %c0_2 = arith.constant 0 : index
    %2 = vector.load %arg2[%c0_1, %c0_2] : memref<16x384xbf16, #tpu.memory_space<vmem>>, vector<16x384xbf16>
    %cst = arith.constant dense<0.000000e+00> : vector<8x384xf32>
    %3 = tpu.matmul %1, %2, %cst {dimension_numbers = #tpu.dot_dimension_numbers<[1], [0], [0], [1], [0, 0, 1, 1], [], []>} : vector<8x16xbf16>, vector<16x384xbf16>, vector<8x384xf32> -> vector<8x384xf32>
    %c0_3 = arith.constant 0 : index
    %c0_4 = arith.constant 0 : index
    %4 = vector.load %arg3[%c0_3, %c0_4] : memref<1x384xf32, #tpu.memory_space<vmem>>, vector<1x384xf32>
    %5 = vector.broadcast %4 : vector<1x384xf32> to vector<8x384xf32>
    %6 = arith.addf %3, %5 : vector<8x384xf32>
    %cst_5 = arith.constant 0.000000e+00 : f32
    %7 = vector.broadcast %cst_5 : f32 to vector<8x384xf32>
    %8 = arith.maximumf %6, %7 : vector<8x384xf32>
    %9 = arith.truncf %8 : vector<8x384xf32> to vector<8x384xbf16>
    %c0_6 = arith.constant 0 : index
    %c0_7 = arith.constant 0 : index
    %10 = vector.load %arg4[%c0_6, %c0_7] : memref<384x384xbf16, #tpu.memory_space<vmem>>, vector<384x384xbf16>
    %cst_8 = arith.constant dense<0.000000e+00> : vector<8x384xf32>
    %11 = tpu.matmul %9, %10, %cst_8 {dimension_numbers = #tpu.dot_dimension_numbers<[1], [0], [0], [1], [0, 0, 1, 1], [], []>} : vector<8x384xbf16>, vector<384x384xbf16>, vector<8x384xf32> -> vector<8x384xf32>
    %c0_9 = arith.constant 0 : index
    %c0_10 = arith.constant 0 : index
    %12 = vector.load %arg5[%c0_9, %c0_10] : memref<1x384xf32, #tpu.memory_space<vmem>>, vector<1x384xf32>
    %13 = vector.broadcast %12 : vector<1x384xf32> to vector<8x384xf32>
    %14 = arith.addf %11, %13 : vector<8x384xf32>
    %cst_11 = arith.constant 0.000000e+00 : f32
    %15 = vector.broadcast %cst_11 : f32 to vector<8x384xf32>
    %16 = arith.maximumf %14, %15 : vector<8x384xf32>
    %17 = arith.truncf %16 : vector<8x384xf32> to vector<8x384xbf16>
    %c0_12 = arith.constant 0 : index
    %c0_13 = arith.constant 0 : index
    %18 = vector.load %arg6[%c0_12, %c0_13] : memref<384x384xbf16, #tpu.memory_space<vmem>>, vector<384x384xbf16>
    %cst_14 = arith.constant dense<0.000000e+00> : vector<8x384xf32>
    %19 = tpu.matmul %17, %18, %cst_14 {dimension_numbers = #tpu.dot_dimension_numbers<[1], [0], [0], [1], [0, 0, 1, 1], [], []>} : vector<8x384xbf16>, vector<384x384xbf16>, vector<8x384xf32> -> vector<8x384xf32>
    %c0_15 = arith.constant 0 : index
    %c0_16 = arith.constant 0 : index
    %20 = vector.load %arg7[%c0_15, %c0_16] : memref<1x384xf32, #tpu.memory_space<vmem>>, vector<1x384xf32>
    %21 = vector.broadcast %20 : vector<1x384xf32> to vector<8x384xf32>
    %22 = arith.addf %19, %21 : vector<8x384xf32>
    %cst_17 = arith.constant 0.000000e+00 : f32
    %23 = vector.broadcast %cst_17 : f32 to vector<8x384xf32>
    %24 = arith.maximumf %22, %23 : vector<8x384xf32>
    %25 = arith.truncf %24 : vector<8x384xf32> to vector<8x384xbf16>
    %c0_18 = arith.constant 0 : index
    %c0_19 = arith.constant 0 : index
    %26 = vector.load %arg8[%c0_18, %c0_19] : memref<384x128xbf16, #tpu.memory_space<vmem>>, vector<384x128xbf16>
    %cst_20 = arith.constant dense<0.000000e+00> : vector<8x128xf32>
    %27 = tpu.matmul %25, %26, %cst_20 {dimension_numbers = #tpu.dot_dimension_numbers<[1], [0], [0], [1], [0, 0, 1, 1], [], []>} : vector<8x384xbf16>, vector<384x128xbf16>, vector<8x128xf32> -> vector<8x128xf32>
    %c0_21 = arith.constant 0 : index
    %c0_22 = arith.constant 0 : index
    %28 = vector.load %arg9[%c0_21, %c0_22] : memref<1x128xf32, #tpu.memory_space<vmem>>, vector<1x128xf32>
    %29 = vector.broadcast %28 : vector<1x128xf32> to vector<8x128xf32>
    %30 = arith.addf %27, %29 : vector<8x128xf32>
    %c0_23 = arith.constant 0 : index
    %c0_24 = arith.constant 0 : index
    %31 = vector.load %arg10[%c0_23, %c0_24] : memref<8x128xf32, #tpu.memory_space<vmem>>, vector<8x128xf32>
    tpu.vector_store %arg10[%c0_23, %c0_24], %30 {strides = array<i32>} : memref<8x128xf32, #tpu.memory_space<vmem>>, vector<8x128xf32>,
    return
  }
  func.func @transform_0(%arg0: i32) -> (i32, i32) {
    %c0_i32 = arith.constant 0 : i32
    %c0_i32_0 = arith.constant 0 : i32
    return %arg0, %c0_i32 : i32, i32
  }
  func.func @transform_1(%arg0: i32) -> (i32, i32) {
    %c0_i32 = arith.constant 0 : i32
    %c0_i32_0 = arith.constant 0 : i32
    %c0_i32_1 = arith.constant 0 : i32
    return %c0_i32, %c0_i32_0 : i32, i32
  }
  func.func @transform_2(%arg0: i32) -> (i32, i32) {
    %c0_i32 = arith.constant 0 : i32
    %c0_i32_0 = arith.constant 0 : i32
    %c0_i32_1 = arith.constant 0 : i32
    return %c0_i32, %c0_i32_0 : i32, i32
  }
  func.func @transform_3(%arg0: i32) -> (i32, i32) {
    %c0_i32 = arith.constant 0 : i32
    %c0_i32_0 = arith.constant 0 : i32
    %c0_i32_1 = arith.constant 0 : i32
    return %c0_i32, %c0_i32_0 : i32, i32
  }
  func.func @transform_4(%arg0: i32) -> (i32, i32) {
    %c0_i32 = arith.constant 0 : i32
    %c0_i32_0 = arith.constant 0 : i32
    %c0_i32_1 = arith.constant 0 : i32
    return %c0_i32, %c0_i32_0 : i32, i32
  }
  func.func @transform_5(%arg0: i32) -> (i32, i32) {
    %c0_i32 = arith.constant 0 : i32
    %c0_i32_0 = arith.constant 0 : i32
    %c0_i32_1 = arith.constant 0 : i32
    return %c0_i32, %c0_i32_0 : i32, i32
  }
  func.func @transform_6(%arg0: i32) -> (i32, i32) {
    %c0_i32 = arith.constant 0 : i32
    %c0_i32_0 = arith.constant 0 : i32
    %c0_i32_1 = arith.constant 0 : i32
    return %c0_i32, %c0_i32_0 : i32, i32
  }
  func.func @transform_7(%arg0: i32) -> (i32, i32) {
    %c0_i32 = arith.constant 0 : i32
    %c0_i32_0 = arith.constant 0 : i32
    %c0_i32_1 = arith.constant 0 : i32
    return %c0_i32, %c0_i32_0 : i32, i32
  }
  func.func @transform_8(%arg0: i32) -> (i32, i32) {
    %c0_i32 = arith.constant 0 : i32
    %c0_i32_0 = arith.constant 0 : i32
    %c0_i32_1 = arith.constant 0 : i32
    return %c0_i32, %c0_i32_0 : i32, i32
  }
  func.func @transform_9(%arg0: i32) -> (i32, i32) {
    %c0_i32 = arith.constant 0 : i32
    %c0_i32_0 = arith.constant 0 : i32
    return %arg0, %c0_i32 : i32, i32
  }
}

</mosaic_0001>

<llo_original>
// kernel: mlp_forward.1
$region0: #{mlp_forward.1}
  #allocation0 [shape = 'u32[]', space=smem, size = 0x4, offset = 0x4, fixed_abs, tag = 'smem constant byte address 0x4 - core index']
  #allocation1 [shape = 'u32[72,128]{1,0:T(1,128)}', space=vmem, size = 0x9000, scoped, tag = 'internal scratch']
  %s0 = inlined_call_operand.vmem [shape: f32[8,16], index: 0, kind: input, shape index: {}]
  %s1 = inlined_call_operand.hbm [shape: bf16[16,384], index: 1, kind: input, shape index: {}]
  %s2 = inlined_call_operand.vmem [shape: f32[1,384], index: 2, kind: input, shape index: {}]
  %s3 = inlined_call_operand.hbm [shape: bf16[384,384], index: 3, kind: input, shape index: {}]
  %s4 = inlined_call_operand.vmem [shape: f32[1,384], index: 4, kind: input, shape index: {}]
  %s5 = inlined_call_operand.hbm [shape: bf16[384,384], index: 5, kind: input, shape index: {}]
  %s6 = inlined_call_operand.vmem [shape: f32[1,384], index: 6, kind: input, shape index: {}]
  %s7 = inlined_call_operand.hbm [shape: bf16[384,128], index: 7, kind: input, shape index: {}]
  %s8 = inlined_call_operand.vmem [shape: f32[1,128], index: 8, kind: input, shape index: {}]
  %s9 = inlined_call_operand.vmem [shape: f32[8,128], index: 9, kind: output, shape index: {}]
  %s10 = sld [smem:[#allocation0]]
  $region62: #{mlp_forward.1} parent=0
    _
  %s12 = ssub.s32 1, %s10
  %s13 = scalar_select 0, %s12, %s10
  $region1: #{mlp_forward.1} parent=0
    #allocation2 [shape = 'u8[12288]{0}', space=vmem, size = 0x3000, scoped, tag = 'input window, operand 1, single buffered']
    #allocation3 [shape = 's32[1]{0}', space=sflag, size = 0x4, scoped, tag = 'scoped memory for mlp_forward.1']
    #allocation4 [shape = 'u8[294912]{0}', space=vmem, size = 0x48000, scoped, tag = 'input window, operand 3, single buffered']
    #allocation5 [shape = 's32[1]{0}', space=sflag, size = 0x4, scoped, tag = 'scoped memory for mlp_forward.1']
    #allocation6 [shape = 'u8[294912]{0}', space=vmem, size = 0x48000, scoped, tag = 'input window, operand 5, single buffered']
    #allocation7 [shape = 'u8[98304]{0}', space=vmem, size = 0x18000, scoped, tag = 'input window, operand 7, single buffered']
    #allocation8 [shape = 's32[1]{0}', space=sflag, size = 0x4, scoped, tag = 'scoped memory for mlp_forward.1']
    %14 = vsyncpa [#allocation3], 0
    %15 = vsyncpa [#allocation5], 0
    %16 = vsyncpa [#allocation8], 0
    // Predicated region
    $region2: #{mlp_forward.1} parent=1 // pred_check
      _
    $region3: #{mlp_forward.1} parent=1 // pred_check_branch
      %18 = sbr.rel (0) target = $region5
    $region4: #{mlp_forward.1} parent=1 // pred_region
      _
    $region5: #{mlp_forward.1} parent=1 // pred_fallthru
      _
    // Predicated region
    $region6: #{mlp_forward.1} parent=1 // pred_check
      _
    $region7: #{mlp_forward.1} parent=1 // pred_check_branch
      %20 = sbr.rel (0) target = $region9
    $region8: #{mlp_forward.1} parent=1 // pred_region
      %22 = vsyncadd [#allocation3], 0
      %s23 = sshll.u32 %s1, 4
      %s24 = int_to_ptr.hbm [resolvable:$true] %s23
      %s25 = sshll.u32 [#allocation2], 4
      %s26 = int_to_ptr.vmem [resolvable:$true] %s25
      %31 = dma.hbm_to_vmem [thread:$0]  %s24, 384, %s26, [#allocation3], 192, 192, 12
    $region9: #{mlp_forward.1} parent=1 // pred_fallthru
      _
    // Predicated region
    $region10: #{mlp_forward.1} parent=1 // pred_check
      _
    $region11: #{mlp_forward.1} parent=1 // pred_check_branch
      %33 = sbr.rel (0) target = $region13
    $region12: #{mlp_forward.1} parent=1 // pred_region
      _
    $region13: #{mlp_forward.1} parent=1 // pred_fallthru
      _
    // Predicated region
    $region14: #{mlp_forward.1} parent=1 // pred_check
      _
    $region15: #{mlp_forward.1} parent=1 // pred_check_branch
      %35 = sbr.rel (0) target = $region17
    $region16: #{mlp_forward.1} parent=1 // pred_region
      %37 = vsyncadd [#allocation5], 0
      %s38 = sshll.u32 %s3, 4
      %s39 = int_to_ptr.hbm [resolvable:$true] %s38
      %s40 = sshll.u32 [#allocation4], 4
      %s41 = int_to_ptr.vmem [resolvable:$true] %s40
      %46 = dma.hbm_to_vmem [thread:$0]  %s39, 9216, %s41, [#allocation5], 192, 192, 12
    $region17: #{mlp_forward.1} parent=1 // pred_fallthru
      _
    // Predicated region
    $region18: #{mlp_forward.1} parent=1 // pred_check
      _
    $region19: #{mlp_forward.1} parent=1 // pred_check_branch
      %48 = sbr.rel (0) target = $region21
    $region20: #{mlp_forward.1} parent=1 // pred_region
      _
    $region21: #{mlp_forward.1} parent=1 // pred_fallthru
      _
    // Predicated region
    $region22: #{mlp_forward.1} parent=1 // pred_check
      _
    $region23: #{mlp_forward.1} parent=1 // pred_check_branch
      %50 = sbr.rel (0) target = $region25
    $region24: #{mlp_forward.1} parent=1 // pred_region
      %52 = vsyncadd [#allocation5], 0
      %s53 = sshll.u32 %s5, 4
      %s54 = int_to_ptr.hbm [resolvable:$true] %s53
      %s55 = sshll.u32 [#allocation6], 4
      %s56 = int_to_ptr.vmem [resolvable:$true] %s55
      %61 = dma.hbm_to_vmem [thread:$0]  %s54, 9216, %s56, [#allocation5], 192, 192, 12
    $region25: #{mlp_forward.1} parent=1 // pred_fallthru
      _
    // Predicated region
    $region26: #{mlp_forward.1} parent=1 // pred_check
      _
    $region27: #{mlp_forward.1} parent=1 // pred_check_branch
      %63 = sbr.rel (0) target = $region29
    $region28: #{mlp_forward.1} parent=1 // pred_region
      _
    $region29: #{mlp_forward.1} parent=1 // pred_fallthru
      _
    // Predicated region
    $region30: #{mlp_forward.1} parent=1 // pred_check
      _
    $region31: #{mlp_forward.1} parent=1 // pred_check_branch
      %65 = sbr.rel (0) target = $region33
    $region32: #{mlp_forward.1} parent=1 // pred_region
      %67 = vsyncadd [#allocation8], 0
      %s68 = sshll.u32 %s7, 4
      %s69 = int_to_ptr.hbm [resolvable:$true] %s68
      %s70 = sshll.u32 [#allocation7], 4
      %s71 = int_to_ptr.vmem [resolvable:$true] %s70
      %76 = dma.hbm_to_vmem [thread:$0]  %s69, 3072, %s71, [#allocation8], 64, 64, 4
    $region33: #{mlp_forward.1} parent=1 // pred_fallthru
      _
    // Predicated region
    $region34: #{mlp_forward.1} parent=1 // pred_check
      _
    $region35: #{mlp_forward.1} parent=1 // pred_check_branch
      %78 = sbr.rel (0) target = $region37
    $region36: #{mlp_forward.1} parent=1 // pred_region
      _
    $region37: #{mlp_forward.1} parent=1 // pred_fallthru
      _
    // Predicated region
    $region38: #{mlp_forward.1} parent=1 // pred_check
      _
    $region39: #{mlp_forward.1} parent=1 // pred_check_branch
      %80 = sbr.rel (0) target = $region41
    $region40: #{mlp_forward.1} parent=1 // pred_region
      %82 = dma.done [#allocation3], 384
    $region41: #{mlp_forward.1} parent=1 // pred_fallthru
      _
    // Predicated region
    $region42: #{mlp_forward.1} parent=1 // pred_check
      _
    $region43: #{mlp_forward.1} parent=1 // pred_check_branch
      %84 = sbr.rel (0) target = $region45
    $region44: #{mlp_forward.1} parent=1 // pred_region
      %86 = dma.done [#allocation5], 9216
    $region45: #{mlp_forward.1} parent=1 // pred_fallthru
      _
    // Predicated region
    $region46: #{mlp_forward.1} parent=1 // pred_check
      _
    $region47: #{mlp_forward.1} parent=1 // pred_check_branch
      %88 = sbr.rel (0) target = $region49
    $region48: #{mlp_forward.1} parent=1 // pred_region
      %90 = dma.done [#allocation5], 9216
    $region49: #{mlp_forward.1} parent=1 // pred_fallthru
      _
    // Predicated region
    $region50: #{mlp_forward.1} parent=1 // pred_check
      _
    $region51: #{mlp_forward.1} parent=1 // pred_check_branch
      %92 = sbr.rel (0) target = $region53
    $region52: #{mlp_forward.1} parent=1 // pred_region
      %94 = dma.done [#allocation8], 3072
    $region53: #{mlp_forward.1} parent=1 // pred_fallthru
      _
    %v96 = vld [vmem:[%s0] sm:$0xff]
    %v97 = vpack.c.bf16 %v96, %v96
    %v98 = vld [vmem:[#allocation2] sm:$0xff]
    %v99 = vld [vmem:[#allocation2 + $0x8] sm:$0xf]
    %v100 = vld [vmem:[#allocation2 + $0xc] sm:$0xff]
    %v101 = vld [vmem:[#allocation2 + $0x14] sm:$0xf]
    %v102 = vld [vmem:[%s2] sm:$0x7]
    %v104 = vperm.slane %v102, 0
    %v105 = vperm.slane %v102, 1
    %v106 = vperm.slane %v102, 2
    %v114 = vunpack.c.l.b16 %v98
    %v115 = vunpack.c.h.b16 %v98
    %v116 = vunpack.c.l.b16 %v99
    %v117 = vunpack.c.l.b16 %v100
    %v118 = vunpack.c.h.b16 %v100
    %v119 = vunpack.c.l.b16 %v101
    %v120 = vpack.c.b16 %v117, %v114
    %v121 = vpack.c.b16 %v118, %v115
    %v122 = vpack.c.b16 %v119, %v116
    %vm126 = vcmask 130048
    %v128 = vsel %vm126, %v97, 0
    %130 = vmatpush.bf16.msra.mxu0 0
    %131 = vmatpush.bf16.msra.mxu0 0
    %132 = vmatpush.bf16.msra.mxu0 0
    %133 = vmatpush.bf16.msra.mxu0 0
    %134 = vmatpush.bf16.msra.mxu0 0
    %135 = vmatpush.bf16.msra.mxu0 0
    %136 = vmatpush.bf16.msra.mxu0 0
    %137 = vmatpush.bf16.msra.mxu0 %v120
    %138 = vmatmul.bf16.gmra.mxu0 %v128
    %v139 = vpop.f32.mrf.mxu0
    %v140 = vadd.f32 %v104, %v139
    %v141 = vpop.f32.mrf.mxu0
    %142 = vdwg.mxu0
    %143 = vmatpush.bf16.msra.mxu0 0
    %144 = vmatpush.bf16.msra.mxu0 0
    %145 = vmatpush.bf16.msra.mxu0 0
    %146 = vmatpush.bf16.msra.mxu0 0
    %147 = vmatpush.bf16.msra.mxu0 0
    %148 = vmatpush.bf16.msra.mxu0 0
    %149 = vmatpush.bf16.msra.mxu0 0
    %150 = vmatpush.bf16.msra.mxu0 %v121
    %151 = vmatmul.bf16.gmra.mxu0 %v128
    %v152 = vpop.f32.mrf.mxu0
    %v153 = vadd.f32 %v105, %v152
    %v154 = vpop.f32.mrf.mxu0
    %155 = vdwg.mxu0
    %156 = vmatpush.bf16.msra.mxu0 0
    %157 = vmatpush.bf16.msra.mxu0 0
    %158 = vmatpush.bf16.msra.mxu0 0
    %159 = vmatpush.bf16.msra.mxu0 0
    %160 = vmatpush.bf16.msra.mxu0 0
    %161 = vmatpush.bf16.msra.mxu0 0
    %162 = vmatpush.bf16.msra.mxu0 0
    %163 = vmatpush.bf16.msra.mxu0 %v122
    %164 = vmatmul.bf16.gmra.mxu0 %v128
    %v165 = vpop.f32.mrf.mxu0
    %v166 = vadd.f32 %v106, %v165
    %v167 = vpop.f32.mrf.mxu0
    %168 = vdwg.mxu0
    %v169 = vmax.f32 %v140, 0.0
    %v170 = vmax.f32 %v153, 0.0
    %v171 = vmax.f32 %v166, 0.0
    %v172 = vpack.c.bf16 %v169, %v169
    %v173 = vpack.c.bf16 %v170, %v170
    %v174 = vpack.c.bf16 %v171, %v171
    %v175 = vld [vmem:[#allocation4] sm:$0xff]
    %v176 = vld [vmem:[#allocation4 + $0x8] sm:$0xf]
    %v177 = vld [vmem:[#allocation4 + $0xc] sm:$0xff]
    %v178 = vld [vmem:[#allocation4 + $0x14] sm:$0xf]
    %v179 = vld [vmem:[#allocation4 + $0x18] sm:$0xff]
    %v180 = vld [vmem:[#allocation4 + $0x20] sm:$0xf]
    %v181 = vld [vmem:[#allocation4 + $0x24] sm:$0xff]
    %v182 = vld [vmem:[#allocation4 + $0x2c] sm:$0xf]
    %v183 = vld [vmem:[#allocation4 + $0x30] sm:$0xff]
    %v184 = vld [vmem:[#allocation4 + $0x38] sm:$0xf]
    %v185 = vld [vmem:[#allocation4 + $0x3c] sm:$0xff]
    %v186 = vld [vmem:[#allocation4 + $0x44] sm:$0xf]
    %v187 = vld [vmem:[#allocation4 + $0x48] sm:$0xff]
    %v188 = vld [vmem:[#allocation4 + $0x50] sm:$0xf]
    %v189 = vld [vmem:[#allocation4 + $0x54] sm:$0xff]
    %v190 = vld [vmem:[#allocation4 + $0x5c] sm:$0xf]
    %v191 = vld [vmem:[#allocation4 + $0x60] sm:$0xff]
    %v192 = vld [vmem:[#allocation4 + $0x68] sm:$0xf]
    %v193 = vld [vmem:[#allocation4 + $0x6c] sm:$0xff]
    %v194 = vld [vmem:[#allocation4 + $0x74] sm:$0xf]
    %v195 = vld [vmem:[#allocation4 + $0x78] sm:$0xff]
    %v196 = vld [vmem:[#allocation4 + $0x80] sm:$0xf]
    %v197 = vld [vmem:[#allocation4 + $0x84] sm:$0xff]
    %v198 = vld [vmem:[#allocation4 + $0x8c] sm:$0xf]
    %v199 = vld [vmem:[#allocation4 + $0x90] sm:$0xff]
    %v200 = vld [vmem:[#allocation4 + $0x98] sm:$0xf]
    %v201 = vld [vmem:[#allocation4 + $0x9c] sm:$0xff]
    %v202 = vld [vmem:[#allocation4 + $0xa4] sm:$0xf]
    %v203 = vld [vmem:[#allocation4 + $0xa8] sm:$0xff]
    %v204 = vld [vmem:[#allocation4 + $0xb0] sm:$0xf]
    %v205 = vld [vmem:[#allocation4 + $0xb4] sm:$0xff]
    %v206 = vld [vmem:[#allocation4 + $0xbc] sm:$0xf]
    %v207 = vld [vmem:[#allocation4 + $0xc0] sm:$0xff]
    %v208 = vld [vmem:[#allocation4 + $0xc8] sm:$0xf]
    %v209 = vld [vmem:[#allocation4 + $0xcc] sm:$0xff]
    %v210 = vld [vmem:[#allocation4 + $0xd4] sm:$0xf]
    %v211 = vld [vmem:[#allocation4 + $0xd8] sm:$0xff]
    %v212 = vld [vmem:[#allocation4 + $0xe0] sm:$0xf]
    %v213 = vld [vmem:[#allocation4 + $0xe4] sm:$0xff]
    %v214 = vld [vmem:[#allocation4 + $0xec] sm:$0xf]
    %v215 = vld [vmem:[#allocation4 + $0xf0] sm:$0xff]
    %v216 = vld [vmem:[#allocation4 + $0xf8] sm:$0xf]
    %v217 = vld [vmem:[#allocation4 + $0xfc] sm:$0xff]
    %v218 = vld [vmem:[#allocation4 + $0x104] sm:$0xf]
    %v219 = vld [vmem:[#allocation4 + $0x108] sm:$0xff]
    %v220 = vld [vmem:[#allocation4 + $0x110] sm:$0xf]
    %v221 = vld [vmem:[#allocation4 + $0x114] sm:$0xff]
    %v222 = vld [vmem:[#allocation4 + $0x11c] sm:$0xf]
    %v223 = vld [vmem:[#allocation4 + $0x120] sm:$0xff]
    %v224 = vld [vmem:[#allocation4 + $0x128] sm:$0xf]
    %v225 = vld [vmem:[#allocation4 + $0x12c] sm:$0xff]
    %v226 = vld [vmem:[#allocation4 + $0x134] sm:$0xf]
    %v227 = vld [vmem:[#allocation4 + $0x138] sm:$0xff]
    %v228 = vld [vmem:[#allocation4 + $0x140] sm:$0xf]
    %v229 = vld [vmem:[#allocation4 + $0x144] sm:$0xff]
    %v230 = vld [vmem:[#allocation4 + $0x14c] sm:$0xf]
    %v231 = vld [vmem:[#allocation4 + $0x150] sm:$0xff]
    %v232 = vld [vmem:[#allocation4 + $0x158] sm:$0xf]
    %v233 = vld [vmem:[#allocation4 + $0x15c] sm:$0xff]
    %v234 = vld [vmem:[#allocation4 + $0x164] sm:$0xf]
    %v235 = vld [vmem:[#allocation4 + $0x168] sm:$0xff]
    %v236 = vld [vmem:[#allocation4 + $0x170] sm:$0xf]
    %v237 = vld [vmem:[#allocation4 + $0x174] sm:$0xff]
    %v238 = vld [vmem:[#allocation4 + $0x17c] sm:$0xf]
    %v239 = vld [vmem:[#allocation4 + $0x180] sm:$0xff]
    %v240 = vld [vmem:[#allocation4 + $0x188] sm:$0xf]
    %v241 = vld [vmem:[#allocation4 + $0x18c] sm:$0xff]
    %v242 = vld [vmem:[#allocation4 + $0x194] sm:$0xf]
    %v243 = vld [vmem:[#allocation4 + $0x198] sm:$0xff]
    %v244 = vld [vmem:[#allocation4 + $0x1a0] sm:$0xf]
    %v245 = vld [vmem:[#allocation4 + $0x1a4] sm:$0xff]
    %v246 = vld [vmem:[#allocation4 + $0x1ac] sm:$0xf]
    %v247 = vld [vmem:[#allocation4 + $0x1b0] sm:$0xff]
    %v248 = vld [vmem:[#allocation4 + $0x1b8] sm:$0xf]
    %v249 = vld [vmem:[#allocation4 + $0x1bc] sm:$0xff]
    %v250 = vld [vmem:[#allocation4 + $0x1c4] sm:$0xf]
    %v251 = vld [vmem:[#allocation4 + $0x1c8] sm:$0xff]
    %v252 = vld [vmem:[#allocation4 + $0x1d0] sm:$0xf]
    %v253 = vld [vmem:[#allocation4 + $0x1d4] sm:$0xff]
    %v254 = vld [vmem:[#allocation4 + $0x1dc] sm:$0xf]
    %v255 = vld [vmem:[#allocation4 + $0x1e0] sm:$0xff]
    %v256 = vld [vmem:[#allocation4 + $0x1e8] sm:$0xf]
    %v257 = vld [vmem:[#allocation4 + $0x1ec] sm:$0xff]
    %v258 = vld [vmem:[#allocation4 + $0x1f4] sm:$0xf]
    %v259 = vld [vmem:[#allocation4 + $0x1f8] sm:$0xff]
    %v260 = vld [vmem:[#allocation4 + $0x200] sm:$0xf]
    %v261 = vld [vmem:[#allocation4 + $0x204] sm:$0xff]
    %v262 = vld [vmem:[#allocation4 + $0x20c] sm:$0xf]
    %v263 = vld [vmem:[#allocation4 + $0x210] sm:$0xff]
    %v264 = vld [vmem:[#allocation4 + $0x218] sm:$0xf]
    %v265 = vld [vmem:[#allocation4 + $0x21c] sm:$0xff]
    %v266 = vld [vmem:[#allocation4 + $0x224] sm:$0xf]
    %v267 = vld [vmem:[#allocation4 + $0x228] sm:$0xff]
    %v268 = vld [vmem:[#allocation4 + $0x230] sm:$0xf]
    %v269 = vld [vmem:[#allocation4 + $0x234] sm:$0xff]
    %v270 = vld [vmem:[#allocation4 + $0x23c] sm:$0xf]
    %v271 = vld [vmem:[%s4] sm:$0x7]
    %v273 = vperm.slane %v271, 0
    %v274 = vperm.slane %v271, 1
    %v275 = vperm.slane %v271, 2
    %v375 = vunpack.c.l.b16 %v175
    %v376 = vunpack.c.h.b16 %v175
    %v377 = vunpack.c.l.b16 %v176
    %v378 = vunpack.c.l.b16 %v177
    %v379 = vunpack.c.h.b16 %v177
    %v380 = vunpack.c.l.b16 %v178
    %v381 = vunpack.c.l.b16 %v179
    %v382 = vunpack.c.h.b16 %v179
    %v383 = vunpack.c.l.b16 %v180
    %v384 = vunpack.c.l.b16 %v181
    %v385 = vunpack.c.h.b16 %v181
    %v386 = vunpack.c.l.b16 %v182
    %v387 = vunpack.c.l.b16 %v183
    %v388 = vunpack.c.h.b16 %v183
    %v389 = vunpack.c.l.b16 %v184
    %v390 = vunpack.c.l.b16 %v185
    %v391 = vunpack.c.h.b16 %v185
    %v392 = vunpack.c.l.b16 %v186
    %v393 = vunpack.c.l.b16 %v187
    %v394 = vunpack.c.h.b16 %v187
    %v395 = vunpack.c.l.b16 %v188
    %v396 = vunpack.c.l.b16 %v189
    %v397 = vunpack.c.h.b16 %v189
    %v398 = vunpack.c.l.b16 %v190
    %v399 = vunpack.c.l.b16 %v191
    %v400 = vunpack.c.h.b16 %v191
    %v401 = vunpack.c.l.b16 %v192
    %v402 = vunpack.c.l.b16 %v193
    %v403 = vunpack.c.h.b16 %v193
    %v404 = vunpack.c.l.b16 %v194
    %v405 = vunpack.c.l.b16 %v195
    %v406 = vunpack.c.h.b16 %v195
    %v407 = vunpack.c.l.b16 %v196
    %v408 = vunpack.c.l.b16 %v197
    %v409 = vunpack.c.h.b16 %v197
    %v410 = vunpack.c.l.b16 %v198
    %v411 = vunpack.c.l.b16 %v199
    %v412 = vunpack.c.h.b16 %v199
    %v413 = vunpack.c.l.b16 %v200
    %v414 = vunpack.c.l.b16 %v201
    %v415 = vunpack.c.h.b16 %v201
    %v416 = vunpack.c.l.b16 %v202
    %v417 = vunpack.c.l.b16 %v203
    %v418 = vunpack.c.h.b16 %v203
    %v419 = vunpack.c.l.b16 %v204
    %v420 = vunpack.c.l.b16 %v205
    %v421 = vunpack.c.h.b16 %v205
    %v422 = vunpack.c.l.b16 %v206
    %v423 = vunpack.c.l.b16 %v207
    %v424 = vunpack.c.h.b16 %v207
    %v425 = vunpack.c.l.b16 %v208
    %v426 = vunpack.c.l.b16 %v209
    %v427 = vunpack.c.h.b16 %v209
    %v428 = vunpack.c.l.b16 %v210
    %v429 = vunpack.c.l.b16 %v211
    %v430 = vunpack.c.h.b16 %v211
    %v431 = vunpack.c.l.b16 %v212
    %v432 = vunpack.c.l.b16 %v213
    %v433 = vunpack.c.h.b16 %v213
    %v434 = vunpack.c.l.b16 %v214
    %v435 = vunpack.c.l.b16 %v215
    %v436 = vunpack.c.h.b16 %v215
    %v437 = vunpack.c.l.b16 %v216
    %v438 = vunpack.c.l.b16 %v217
    %v439 = vunpack.c.h.b16 %v217
    %v440 = vunpack.c.l.b16 %v218
    %v441 = vunpack.c.l.b16 %v219
    %v442 = vunpack.c.h.b16 %v219
    %v443 = vunpack.c.l.b16 %v220
    %v444 = vunpack.c.l.b16 %v221
    %v445 = vunpack.c.h.b16 %v221
    %v446 = vunpack.c.l.b16 %v222
    %v447 = vunpack.c.l.b16 %v223
    %v448 = vunpack.c.h.b16 %v223
    %v449 = vunpack.c.l.b16 %v224
    %v450 = vunpack.c.l.b16 %v225
    %v451 = vunpack.c.h.b16 %v225
    %v452 = vunpack.c.l.b16 %v226
    %v453 = vunpack.c.l.b16 %v227
    %v454 = vunpack.c.h.b16 %v227
    %v455 = vunpack.c.l.b16 %v228
    %v456 = vunpack.c.l.b16 %v229
    %v457 = vunpack.c.h.b16 %v229
    %v458 = vunpack.c.l.b16 %v230
    %v459 = vunpack.c.l.b16 %v231
    %v460 = vunpack.c.h.b16 %v231
    %v461 = vunpack.c.l.b16 %v232
    %v462 = vunpack.c.l.b16 %v233
    %v463 = vunpack.c.h.b16 %v233
    %v464 = vunpack.c.l.b16 %v234
    %v465 = vunpack.c.l.b16 %v235
    %v466 = vunpack.c.h.b16 %v235
    %v467 = vunpack.c.l.b16 %v236
    %v468 = vunpack.c.l.b16 %v237
    %v469 = vunpack.c.h.b16 %v237
    %v470 = vunpack.c.l.b16 %v238
    %v471 = vunpack.c.l.b16 %v239
    %v472 = vunpack.c.h.b16 %v239
    %v473 = vunpack.c.l.b16 %v240
    %v474 = vunpack.c.l.b16 %v241
    %v475 = vunpack.c.h.b16 %v241
    %v476 = vunpack.c.l.b16 %v242
    %v477 = vunpack.c.l.b16 %v243
    %v478 = vunpack.c.h.b16 %v243
    %v479 = vunpack.c.l.b16 %v244
    %v480 = vunpack.c.l.b16 %v245
    %v481 = vunpack.c.h.b16 %v245
    %v482 = vunpack.c.l.b16 %v246
    %v483 = vunpack.c.l.b16 %v247
    %v484 = vunpack.c.h.b16 %v247
    %v485 = vunpack.c.l.b16 %v248
    %v486 = vunpack.c.l.b16 %v249
    %v487 = vunpack.c.h.b16 %v249
    %v488 = vunpack.c.l.b16 %v250
    %v489 = vunpack.c.l.b16 %v251
    %v490 = vunpack.c.h.b16 %v251
    %v491 = vunpack.c.l.b16 %v252
    %v492 = vunpack.c.l.b16 %v253
    %v493 = vunpack.c.h.b16 %v253
    %v494 = vunpack.c.l.b16 %v254
    %v495 = vunpack.c.l.b16 %v255
    %v496 = vunpack.c.h.b16 %v255
    %v497 = vunpack.c.l.b16 %v256
    %v498 = vunpack.c.l.b16 %v257
    %v499 = vunpack.c.h.b16 %v257
    %v500 = vunpack.c.l.b16 %v258
    %v501 = vunpack.c.l.b16 %v259
    %v502 = vunpack.c.h.b16 %v259
    %v503 = vunpack.c.l.b16 %v260
    %v504 = vunpack.c.l.b16 %v261
    %v505 = vunpack.c.h.b16 %v261
    %v506 = vunpack.c.l.b16 %v262
    %v507 = vunpack.c.l.b16 %v263
    %v508 = vunpack.c.h.b16 %v263
    %v509 = vunpack.c.l.b16 %v264
    %v510 = vunpack.c.l.b16 %v265
    %v511 = vunpack.c.h.b16 %v265
    %v512 = vunpack.c.l.b16 %v266
    %v513 = vunpack.c.l.b16 %v267
    %v514 = vunpack.c.h.b16 %v267
    %v515 = vunpack.c.l.b16 %v268
    %v516 = vunpack.c.l.b16 %v269
    %v517 = vunpack.c.h.b16 %v269
    %v518 = vunpack.c.l.b16 %v270
    %v519 = vpack.c.b16 %v378, %v375
    %v520 = vpack.c.b16 %v379, %v376
    %v521 = vpack.c.b16 %v380, %v377
    %v522 = vpack.c.b16 %v384, %v381
    %v523 = vpack.c.b16 %v385, %v382
    %v524 = vpack.c.b16 %v386, %v383
    %v525 = vpack.c.b16 %v390, %v387
    %v526 = vpack.c.b16 %v391, %v388
    %v527 = vpack.c.b16 %v392, %v389
    %v528 = vpack.c.b16 %v396, %v393
    %v529 = vpack.c.b16 %v397, %v394
    %v530 = vpack.c.b16 %v398, %v395
    %v531 = vpack.c.b16 %v402, %v399
    %v532 = vpack.c.b16 %v403, %v400
    %v533 = vpack.c.b16 %v404, %v401
    %v534 = vpack.c.b16 %v408, %v405
    %v535 = vpack.c.b16 %v409, %v406
    %v536 = vpack.c.b16 %v410, %v407
    %v537 = vpack.c.b16 %v414, %v411
    %v538 = vpack.c.b16 %v415, %v412
    %v539 = vpack.c.b16 %v416, %v413
    %v540 = vpack.c.b16 %v420, %v417
    %v541 = vpack.c.b16 %v421, %v418
    %v542 = vpack.c.b16 %v422, %v419
    %v543 = vpack.c.b16 %v426, %v423
    %v544 = vpack.c.b16 %v427, %v424
    %v545 = vpack.c.b16 %v428, %v425
    %v546 = vpack.c.b16 %v432, %v429
    %v547 = vpack.c.b16 %v433, %v430
    %v548 = vpack.c.b16 %v434, %v431
    %v549 = vpack.c.b16 %v438, %v435
    %v550 = vpack.c.b16 %v439, %v436
    %v551 = vpack.c.b16 %v440, %v437
    %v552 = vpack.c.b16 %v444, %v441
    %v553 = vpack.c.b16 %v445, %v442
    %v554 = vpack.c.b16 %v446, %v443
    %v555 = vpack.c.b16 %v450, %v447
    %v556 = vpack.c.b16 %v451, %v448
    %v557 = vpack.c.b16 %v452, %v449
    %v558 = vpack.c.b16 %v456, %v453
    %v559 = vpack.c.b16 %v457, %v454
    %v560 = vpack.c.b16 %v458, %v455
    %v561 = vpack.c.b16 %v462, %v459
    %v562 = vpack.c.b16 %v463, %v460
    %v563 = vpack.c.b16 %v464, %v461
    %v564 = vpack.c.b16 %v468, %v465
    %v565 = vpack.c.b16 %v469, %v466
    %v566 = vpack.c.b16 %v470, %v467
    %v567 = vpack.c.b16 %v474, %v471
    %v568 = vpack.c.b16 %v475, %v472
    %v569 = vpack.c.b16 %v476, %v473
    %v570 = vpack.c.b16 %v480, %v477
    %v571 = vpack.c.b16 %v481, %v478
    %v572 = vpack.c.b16 %v482, %v479
    %v573 = vpack.c.b16 %v486, %v483
    %v574 = vpack.c.b16 %v487, %v484
    %v575 = vpack.c.b16 %v488, %v485
    %v576 = vpack.c.b16 %v492, %v489
    %v577 = vpack.c.b16 %v493, %v490
    %v578 = vpack.c.b16 %v494, %v491
    %v579 = vpack.c.b16 %v498, %v495
    %v580 = vpack.c.b16 %v499, %v496
    %v581 = vpack.c.b16 %v500, %v497
    %v582 = vpack.c.b16 %v504, %v501
    %v583 = vpack.c.b16 %v505, %v502
    %v584 = vpack.c.b16 %v506, %v503
    %v585 = vpack.c.b16 %v510, %v507
    %v586 = vpack.c.b16 %v511, %v508
    %v587 = vpack.c.b16 %v512, %v509
    %v588 = vpack.c.b16 %v516, %v513
    %v589 = vpack.c.b16 %v517, %v514
    %v590 = vpack.c.b16 %v518, %v515
    %663 = vmatpush.bf16.msra.mxu0 %v540
    %664 = vmatpush.bf16.msra.mxu0 %v537
    %665 = vmatpush.bf16.msra.mxu0 %v534
    %666 = vmatpush.bf16.msra.mxu0 %v531
    %667 = vmatpush.bf16.msra.mxu0 %v528
    %668 = vmatpush.bf16.msra.mxu0 %v525
    %669 = vmatpush.bf16.msra.mxu0 %v522
    %670 = vmatpush.bf16.msra.mxu0 %v519
    %671 = vmatmul.bf16.gmra.mxu0 %v172
    %v672 = vpop.f32.mrf.mxu0
    %v673 = vadd.f32 %v273, %v672
    %v674 = vpop.f32.mrf.mxu0
    %675 = vdwg.mxu0
    %676 = vmatpush.bf16.msra.mxu0 %v564
    %677 = vmatpush.bf16.msra.mxu0 %v561
    %678 = vmatpush.bf16.msra.mxu0 %v558
    %679 = vmatpush.bf16.msra.mxu0 %v555
    %680 = vmatpush.bf16.msra.mxu0 %v552
    %681 = vmatpush.bf16.msra.mxu0 %v549
    %682 = vmatpush.bf16.msra.mxu0 %v546
    %683 = vmatpush.bf16.msra.mxu0 %v543
    %684 = vmatmul.bf16.gmra.mxu0 %v173
    %v685 = vpop.f32.mrf.mxu0
    %v686 = vadd.f32 %v673, %v685
    %v687 = vpop.f32.mrf.mxu0
    %688 = vdwg.mxu0
    %689 = vmatpush.bf16.msra.mxu0 %v588
    %690 = vmatpush.bf16.msra.mxu0 %v585
    %691 = vmatpush.bf16.msra.mxu0 %v582
    %692 = vmatpush.bf16.msra.mxu0 %v579
    %693 = vmatpush.bf16.msra.mxu0 %v576
    %694 = vmatpush.bf16.msra.mxu0 %v573
    %695 = vmatpush.bf16.msra.mxu0 %v570
    %696 = vmatpush.bf16.msra.mxu0 %v567
    %697 = vmatmul.bf16.gmra.mxu0 %v174
    %v698 = vpop.f32.mrf.mxu0
    %v699 = vadd.f32 %v686, %v698
    %v700 = vpop.f32.mrf.mxu0
    %701 = vdwg.mxu0
    %702 = vmatpush.bf16.msra.mxu0 %v541
    %703 = vmatpush.bf16.msra.mxu0 %v538
    %704 = vmatpush.bf16.msra.mxu0 %v535
    %705 = vmatpush.bf16.msra.mxu0 %v532
    %706 = vmatpush.bf16.msra.mxu0 %v529
    %707 = vmatpush.bf16.msra.mxu0 %v526
    %708 = vmatpush.bf16.msra.mxu0 %v523
    %709 = vmatpush.bf16.msra.mxu0 %v520
    %710 = vmatmul.bf16.gmra.mxu0 %v172
    %v711 = vpop.f32.mrf.mxu0
    %v712 = vadd.f32 %v274, %v711
    %v713 = vpop.f32.mrf.mxu0
    %714 = vdwg.mxu0
    %715 = vmatpush.bf16.msra.mxu0 %v565
    %716 = vmatpush.bf16.msra.mxu0 %v562
    %717 = vmatpush.bf16.msra.mxu0 %v559
    %718 = vmatpush.bf16.msra.mxu0 %v556
    %719 = vmatpush.bf16.msra.mxu0 %v553
    %720 = vmatpush.bf16.msra.mxu0 %v550
    %721 = vmatpush.bf16.msra.mxu0 %v547
    %722 = vmatpush.bf16.msra.mxu0 %v544
    %723 = vmatmul.bf16.gmra.mxu0 %v173
    %v724 = vpop.f32.mrf.mxu0
    %v725 = vadd.f32 %v712, %v724
    %v726 = vpop.f32.mrf.mxu0
    %727 = vdwg.mxu0
    %728 = vmatpush.bf16.msra.mxu0 %v589
    %729 = vmatpush.bf16.msra.mxu0 %v586
    %730 = vmatpush.bf16.msra.mxu0 %v583
    %731 = vmatpush.bf16.msra.mxu0 %v580
    %732 = vmatpush.bf16.msra.mxu0 %v577
    %733 = vmatpush.bf16.msra.mxu0 %v574
    %734 = vmatpush.bf16.msra.mxu0 %v571
    %735 = vmatpush.bf16.msra.mxu0 %v568
    %736 = vmatmul.bf16.gmra.mxu0 %v174
    %v737 = vpop.f32.mrf.mxu0
    %v738 = vadd.f32 %v725, %v737
    %v739 = vpop.f32.mrf.mxu0
    %740 = vdwg.mxu0
    %741 = vmatpush.bf16.msra.mxu0 %v542
    %742 = vmatpush.bf16.msra.mxu0 %v539
    %743 = vmatpush.bf16.msra.mxu0 %v536
    %744 = vmatpush.bf16.msra.mxu0 %v533
    %745 = vmatpush.bf16.msra.mxu0 %v530
    %746 = vmatpush.bf16.msra.mxu0 %v527
    %747 = vmatpush.bf16.msra.mxu0 %v524
    %748 = vmatpush.bf16.msra.mxu0 %v521
    %749 = vmatmul.bf16.gmra.mxu0 %v172
    %v750 = vpop.f32.mrf.mxu0
    %v751 = vadd.f32 %v275, %v750
    %v752 = vpop.f32.mrf.mxu0
    %753 = vdwg.mxu0
    %754 = vmatpush.bf16.msra.mxu0 %v566
    %755 = vmatpush.bf16.msra.mxu0 %v563
    %756 = vmatpush.bf16.msra.mxu0 %v560
    %757 = vmatpush.bf16.msra.mxu0 %v557
    %758 = vmatpush.bf16.msra.mxu0 %v554
    %759 = vmatpush.bf16.msra.mxu0 %v551
    %760 = vmatpush.bf16.msra.mxu0 %v548
    %761 = vmatpush.bf16.msra.mxu0 %v545
    %762 = vmatmul.bf16.gmra.mxu0 %v173
    %v763 = vpop.f32.mrf.mxu0
    %v764 = vadd.f32 %v751, %v763
    %v765 = vpop.f32.mrf.mxu0
    %766 = vdwg.mxu0
    %767 = vmatpush.bf16.msra.mxu0 %v590
    %768 = vmatpush.bf16.msra.mxu0 %v587
    %769 = vmatpush.bf16.msra.mxu0 %v584
    %770 = vmatpush.bf16.msra.mxu0 %v581
    %771 = vmatpush.bf16.msra.mxu0 %v578
    %772 = vmatpush.bf16.msra.mxu0 %v575
    %773 = vmatpush.bf16.msra.mxu0 %v572
    %774 = vmatpush.bf16.msra.mxu0 %v569
    %775 = vmatmul.bf16.gmra.mxu0 %v174
    %v776 = vpop.f32.mrf.mxu0
    %v777 = vadd.f32 %v764, %v776
    %v778 = vpop.f32.mrf.mxu0
    %779 = vdwg.mxu0
    %v780 = vmax.f32 %v699, 0.0
    %v781 = vmax.f32 %v738, 0.0
    %v782 = vmax.f32 %v777, 0.0
    %v783 = vpack.c.bf16 %v780, %v780
    %v784 = vpack.c.bf16 %v781, %v781
    %v785 = vpack.c.bf16 %v782, %v782
    %v786 = vld [vmem:[#allocation6] sm:$0xff]
    %v787 = vld [vmem:[#allocation6 + $0x8] sm:$0xf]
    %v788 = vld [vmem:[#allocation6 + $0xc] sm:$0xff]
    %v789 = vld [vmem:[#allocation6 + $0x14] sm:$0xf]
    %v790 = vld [vmem:[#allocation6 + $0x18] sm:$0xff]
    %v791 = vld [vmem:[#allocation6 + $0x20] sm:$0xf]
    %v792 = vld [vmem:[#allocation6 + $0x24] sm:$0xff]
    %v793 = vld [vmem:[#allocation6 + $0x2c] sm:$0xf]
    %v794 = vld [vmem:[#allocation6 + $0x30] sm:$0xff]
    %v795 = vld [vmem:[#allocation6 + $0x38] sm:$0xf]
    %v796 = vld [vmem:[#allocation6 + $0x3c] sm:$0xff]
    %v797 = vld [vmem:[#allocation6 + $0x44] sm:$0xf]
    %v798 = vld [vmem:[#allocation6 + $0x48] sm:$0xff]
    %v799 = vld [vmem:[#allocation6 + $0x50] sm:$0xf]
    %v800 = vld [vmem:[#allocation6 + $0x54] sm:$0xff]
    %v801 = vld [vmem:[#allocation6 + $0x5c] sm:$0xf]
    %v802 = vld [vmem:[#allocation6 + $0x60] sm:$0xff]
    %v803 = vld [vmem:[#allocation6 + $0x68] sm:$0xf]
    %v804 = vld [vmem:[#allocation6 + $0x6c] sm:$0xff]
    %v805 = vld [vmem:[#allocation6 + $0x74] sm:$0xf]
    %v806 = vld [vmem:[#allocation6 + $0x78] sm:$0xff]
    %v807 = vld [vmem:[#allocation6 + $0x80] sm:$0xf]
    %v808 = vld [vmem:[#allocation6 + $0x84] sm:$0xff]
    %v809 = vld [vmem:[#allocation6 + $0x8c] sm:$0xf]
    %v810 = vld [vmem:[#allocation6 + $0x90] sm:$0xff]
    %v811 = vld [vmem:[#allocation6 + $0x98] sm:$0xf]
    %v812 = vld [vmem:[#allocation6 + $0x9c] sm:$0xff]
    %v813 = vld [vmem:[#allocation6 + $0xa4] sm:$0xf]
    %v814 = vld [vmem:[#allocation6 + $0xa8] sm:$0xff]
    %v815 = vld [vmem:[#allocation6 + $0xb0] sm:$0xf]
    %v816 = vld [vmem:[#allocation6 + $0xb4] sm:$0xff]
    %v817 = vld [vmem:[#allocation6 + $0xbc] sm:$0xf]
    %v818 = vld [vmem:[#allocation6 + $0xc0] sm:$0xff]
    %v819 = vld [vmem:[#allocation6 + $0xc8] sm:$0xf]
    %v820 = vld [vmem:[#allocation6 + $0xcc] sm:$0xff]
    %v821 = vld [vmem:[#allocation6 + $0xd4] sm:$0xf]
    %v822 = vld [vmem:[#allocation6 + $0xd8] sm:$0xff]
    %v823 = vld [vmem:[#allocation6 + $0xe0] sm:$0xf]
    %v824 = vld [vmem:[#allocation6 + $0xe4] sm:$0xff]
    %v825 = vld [vmem:[#allocation6 + $0xec] sm:$0xf]
    %v826 = vld [vmem:[#allocation6 + $0xf0] sm:$0xff]
    %v827 = vld [vmem:[#allocation6 + $0xf8] sm:$0xf]
    %v828 = vld [vmem:[#allocation6 + $0xfc] sm:$0xff]
    %v829 = vld [vmem:[#allocation6 + $0x104] sm:$0xf]
    %v830 = vld [vmem:[#allocation6 + $0x108] sm:$0xff]
    %v831 = vld [vmem:[#allocation6 + $0x110] sm:$0xf]
    %v832 = vld [vmem:[#allocation6 + $0x114] sm:$0xff]
    %v833 = vld [vmem:[#allocation6 + $0x11c] sm:$0xf]
    %v834 = vld [vmem:[#allocation6 + $0x120] sm:$0xff]
    %v835 = vld [vmem:[#allocation6 + $0x128] sm:$0xf]
    %v836 = vld [vmem:[#allocation6 + $0x12c] sm:$0xff]
    %v837 = vld [vmem:[#allocation6 + $0x134] sm:$0xf]
    %v838 = vld [vmem:[#allocation6 + $0x138] sm:$0xff]
    %v839 = vld [vmem:[#allocation6 + $0x140] sm:$0xf]
    %v840 = vld [vmem:[#allocation6 + $0x144] sm:$0xff]
    %v841 = vld [vmem:[#allocation6 + $0x14c] sm:$0xf]
    %v842 = vld [vmem:[#allocation6 + $0x150] sm:$0xff]
    %v843 = vld [vmem:[#allocation6 + $0x158] sm:$0xf]
    %v844 = vld [vmem:[#allocation6 + $0x15c] sm:$0xff]
    %v845 = vld [vmem:[#allocation6 + $0x164] sm:$0xf]
    %v846 = vld [vmem:[#allocation6 + $0x168] sm:$0xff]
    %v847 = vld [vmem:[#allocation6 + $0x170] sm:$0xf]
    %v848 = vld [vmem:[#allocation6 + $0x174] sm:$0xff]
    %v849 = vld [vmem:[#allocation6 + $0x17c] sm:$0xf]
    %v850 = vld [vmem:[#allocation6 + $0x180] sm:$0xff]
    %v851 = vld [vmem:[#allocation6 + $0x188] sm:$0xf]
    %v852 = vld [vmem:[#allocation6 + $0x18c] sm:$0xff]
    %v853 = vld [vmem:[#allocation6 + $0x194] sm:$0xf]
    %v854 = vld [vmem:[#allocation6 + $0x198] sm:$0xff]
    %v855 = vld [vmem:[#allocation6 + $0x1a0] sm:$0xf]
    %v856 = vld [vmem:[#allocation6 + $0x1a4] sm:$0xff]
    %v857 = vld [vmem:[#allocation6 + $0x1ac] sm:$0xf]
    %v858 = vld [vmem:[#allocation6 + $0x1b0] sm:$0xff]
    %v859 = vld [vmem:[#allocation6 + $0x1b8] sm:$0xf]
    %v860 = vld [vmem:[#allocation6 + $0x1bc] sm:$0xff]
    %v861 = vld [vmem:[#allocation6 + $0x1c4] sm:$0xf]
    %v862 = vld [vmem:[#allocation6 + $0x1c8] sm:$0xff]
    %v863 = vld [vmem:[#allocation6 + $0x1d0] sm:$0xf]
    %v864 = vld [vmem:[#allocation6 + $0x1d4] sm:$0xff]
    %v865 = vld [vmem:[#allocation6 + $0x1dc] sm:$0xf]
    %v866 = vld [vmem:[#allocation6 + $0x1e0] sm:$0xff]
    %v867 = vld [vmem:[#allocation6 + $0x1e8] sm:$0xf]
    %v868 = vld [vmem:[#allocation6 + $0x1ec] sm:$0xff]
    %v869 = vld [vmem:[#allocation6 + $0x1f4] sm:$0xf]
    %v870 = vld [vmem:[#allocation6 + $0x1f8] sm:$0xff]
    %v871 = vld [vmem:[#allocation6 + $0x200] sm:$0xf]
    %v872 = vld [vmem:[#allocation6 + $0x204] sm:$0xff]
    %v873 = vld [vmem:[#allocation6 + $0x20c] sm:$0xf]
    %v874 = vld [vmem:[#allocation6 + $0x210] sm:$0xff]
    %v875 = vld [vmem:[#allocation6 + $0x218] sm:$0xf]
    %v876 = vld [vmem:[#allocation6 + $0x21c] sm:$0xff]
    %v877 = vld [vmem:[#allocation6 + $0x224] sm:$0xf]
    %v878 = vld [vmem:[#allocation6 + $0x228] sm:$0xff]
    %v879 = vld [vmem:[#allocation6 + $0x230] sm:$0xf]
    %v880 = vld [vmem:[#allocation6 + $0x234] sm:$0xff]
    %v881 = vld [vmem:[#allocation6 + $0x23c] sm:$0xf]
    %v882 = vld [vmem:[%s6] sm:$0x7]
    %v884 = vperm.slane %v882, 0
    %v885 = vperm.slane %v882, 1
    %v886 = vperm.slane %v882, 2
    %v986 = vunpack.c.l.b16 %v786
    %v987 = vunpack.c.h.b16 %v786
    %v988 = vunpack.c.l.b16 %v787
    %v989 = vunpack.c.l.b16 %v788
    %v990 = vunpack.c.h.b16 %v788
    %v991 = vunpack.c.l.b16 %v789
    %v992 = vunpack.c.l.b16 %v790
    %v993 = vunpack.c.h.b16 %v790
    %v994 = vunpack.c.l.b16 %v791
    %v995 = vunpack.c.l.b16 %v792
    %v996 = vunpack.c.h.b16 %v792
    %v997 = vunpack.c.l.b16 %v793
    %v998 = vunpack.c.l.b16 %v794
    %v999 = vunpack.c.h.b16 %v794
    %v1000 = vunpack.c.l.b16 %v795
    %v1001 = vunpack.c.l.b16 %v796
    %v1002 = vunpack.c.h.b16 %v796
    %v1003 = vunpack.c.l.b16 %v797
    %v1004 = vunpack.c.l.b16 %v798
    %v1005 = vunpack.c.h.b16 %v798
    %v1006 = vunpack.c.l.b16 %v799
    %v1007 = vunpack.c.l.b16 %v800
    %v1008 = vunpack.c.h.b16 %v800
    %v1009 = vunpack.c.l.b16 %v801
    %v1010 = vunpack.c.l.b16 %v802
    %v1011 = vunpack.c.h.b16 %v802
    %v1012 = vunpack.c.l.b16 %v803
    %v1013 = vunpack.c.l.b16 %v804
    %v1014 = vunpack.c.h.b16 %v804
    %v1015 = vunpack.c.l.b16 %v805
    %v1016 = vunpack.c.l.b16 %v806
    %v1017 = vunpack.c.h.b16 %v806
    %v1018 = vunpack.c.l.b16 %v807
    %v1019 = vunpack.c.l.b16 %v808
    %v1020 = vunpack.c.h.b16 %v808
    %v1021 = vunpack.c.l.b16 %v809
    %v1022 = vunpack.c.l.b16 %v810
    %v1023 = vunpack.c.h.b16 %v810
    %v1024 = vunpack.c.l.b16 %v811
    %v1025 = vunpack.c.l.b16 %v812
    %v1026 = vunpack.c.h.b16 %v812
    %v1027 = vunpack.c.l.b16 %v813
    %v1028 = vunpack.c.l.b16 %v814
    %v1029 = vunpack.c.h.b16 %v814
    %v1030 = vunpack.c.l.b16 %v815
    %v1031 = vunpack.c.l.b16 %v816
    %v1032 = vunpack.c.h.b16 %v816
    %v1033 = vunpack.c.l.b16 %v817
    %v1034 = vunpack.c.l.b16 %v818
    %v1035 = vunpack.c.h.b16 %v818
    %v1036 = vunpack.c.l.b16 %v819
    %v1037 = vunpack.c.l.b16 %v820
    %v1038 = vunpack.c.h.b16 %v820
    %v1039 = vunpack.c.l.b16 %v821
    %v1040 = vunpack.c.l.b16 %v822
    %v1041 = vunpack.c.h.b16 %v822
    %v1042 = vunpack.c.l.b16 %v823
    %v1043 = vunpack.c.l.b16 %v824
    %v1044 = vunpack.c.h.b16 %v824
    %v1045 = vunpack.c.l.b16 %v825
    %v1046 = vunpack.c.l.b16 %v826
    %v1047 = vunpack.c.h.b16 %v826
    %v1048 = vunpack.c.l.b16 %v827
    %v1049 = vunpack.c.l.b16 %v828
    %v1050 = vunpack.c.h.b16 %v828
    %v1051 = vunpack.c.l.b16 %v829
    %v1052 = vunpack.c.l.b16 %v830
    %v1053 = vunpack.c.h.b16 %v830
    %v1054 = vunpack.c.l.b16 %v831
    %v1055 = vunpack.c.l.b16 %v832
    %v1056 = vunpack.c.h.b16 %v832
    %v1057 = vunpack.c.l.b16 %v833
    %v1058 = vunpack.c.l.b16 %v834
    %v1059 = vunpack.c.h.b16 %v834
    %v1060 = vunpack.c.l.b16 %v835
    %v1061 = vunpack.c.l.b16 %v836
    %v1062 = vunpack.c.h.b16 %v836
    %v1063 = vunpack.c.l.b16 %v837
    %v1064 = vunpack.c.l.b16 %v838
    %v1065 = vunpack.c.h.b16 %v838
    %v1066 = vunpack.c.l.b16 %v839
    %v1067 = vunpack.c.l.b16 %v840
    %v1068 = vunpack.c.h.b16 %v840
    %v1069 = vunpack.c.l.b16 %v841
    %v1070 = vunpack.c.l.b16 %v842
    %v1071 = vunpack.c.h.b16 %v842
    %v1072 = vunpack.c.l.b16 %v843
    %v1073 = vunpack.c.l.b16 %v844
    %v1074 = vunpack.c.h.b16 %v844
    %v1075 = vunpack.c.l.b16 %v845
    %v1076 = vunpack.c.l.b16 %v846
    %v1077 = vunpack.c.h.b16 %v846
    %v1078 = vunpack.c.l.b16 %v847
    %v1079 = vunpack.c.l.b16 %v848
    %v1080 = vunpack.c.h.b16 %v848
    %v1081 = vunpack.c.l.b16 %v849
    %v1082 = vunpack.c.l.b16 %v850
    %v1083 = vunpack.c.h.b16 %v850
    %v1084 = vunpack.c.l.b16 %v851
    %v1085 = vunpack.c.l.b16 %v852
    %v1086 = vunpack.c.h.b16 %v852
    %v1087 = vunpack.c.l.b16 %v853
    %v1088 = vunpack.c.l.b16 %v854
    %v1089 = vunpack.c.h.b16 %v854
    %v1090 = vunpack.c.l.b16 %v855
    %v1091 = vunpack.c.l.b16 %v856
    %v1092 = vunpack.c.h.b16 %v856
    %v1093 = vunpack.c.l.b16 %v857
    %v1094 = vunpack.c.l.b16 %v858
    %v1095 = vunpack.c.h.b16 %v858
    %v1096 = vunpack.c.l.b16 %v859
    %v1097 = vunpack.c.l.b16 %v860
    %v1098 = vunpack.c.h.b16 %v860
    %v1099 = vunpack.c.l.b16 %v861
    %v1100 = vunpack.c.l.b16 %v862
    %v1101 = vunpack.c.h.b16 %v862
    %v1102 = vunpack.c.l.b16 %v863
    %v1103 = vunpack.c.l.b16 %v864
    %v1104 = vunpack.c.h.b16 %v864
    %v1105 = vunpack.c.l.b16 %v865
    %v1106 = vunpack.c.l.b16 %v866
    %v1107 = vunpack.c.h.b16 %v866
    %v1108 = vunpack.c.l.b16 %v867
    %v1109 = vunpack.c.l.b16 %v868
    %v1110 = vunpack.c.h.b16 %v868
    %v1111 = vunpack.c.l.b16 %v869
    %v1112 = vunpack.c.l.b16 %v870
    %v1113 = vunpack.c.h.b16 %v870
    %v1114 = vunpack.c.l.b16 %v871
    %v1115 = vunpack.c.l.b16 %v872
    %v1116 = vunpack.c.h.b16 %v872
    %v1117 = vunpack.c.l.b16 %v873
    %v1118 = vunpack.c.l.b16 %v874
    %v1119 = vunpack.c.h.b16 %v874
    %v1120 = vunpack.c.l.b16 %v875
    %v1121 = vunpack.c.l.b16 %v876
    %v1122 = vunpack.c.h.b16 %v876
    %v1123 = vunpack.c.l.b16 %v877
    %v1124 = vunpack.c.l.b16 %v878
    %v1125 = vunpack.c.h.b16 %v878
    %v1126 = vunpack.c.l.b16 %v879
    %v1127 = vunpack.c.l.b16 %v880
    %v1128 = vunpack.c.h.b16 %v880
    %v1129 = vunpack.c.l.b16 %v881
    %v1130 = vpack.c.b16 %v989, %v986
    %v1131 = vpack.c.b16 %v990, %v987
    %v1132 = vpack.c.b16 %v991, %v988
    %v1133 = vpack.c.b16 %v995, %v992
    %v1134 = vpack.c.b16 %v996, %v993
    %v1135 = vpack.c.b16 %v997, %v994
    %v1136 = vpack.c.b16 %v1001, %v998
    %v1137 = vpack.c.b16 %v1002, %v999
    %v1138 = vpack.c.b16 %v1003, %v1000
    %v1139 = vpack.c.b16 %v1007, %v1004
    %v1140 = vpack.c.b16 %v1008, %v1005
    %v1141 = vpack.c.b16 %v1009, %v1006
    %v1142 = vpack.c.b16 %v1013, %v1010
    %v1143 = vpack.c.b16 %v1014, %v1011
    %v1144 = vpack.c.b16 %v1015, %v1012
    %v1145 = vpack.c.b16 %v1019, %v1016
    %v1146 = vpack.c.b16 %v1020, %v1017
    %v1147 = vpack.c.b16 %v1021, %v1018
    %v1148 = vpack.c.b16 %v1025, %v1022
    %v1149 = vpack.c.b16 %v1026, %v1023
    %v1150 = vpack.c.b16 %v1027, %v1024
    %v1151 = vpack.c.b16 %v1031, %v1028
    %v1152 = vpack.c.b16 %v1032, %v1029
    %v1153 = vpack.c.b16 %v1033, %v1030
    %v1154 = vpack.c.b16 %v1037, %v1034
    %v1155 = vpack.c.b16 %v1038, %v1035
    %v1156 = vpack.c.b16 %v1039, %v1036
    %v1157 = vpack.c.b16 %v1043, %v1040
    %v1158 = vpack.c.b16 %v1044, %v1041
    %v1159 = vpack.c.b16 %v1045, %v1042
    %v1160 = vpack.c.b16 %v1049, %v1046
    %v1161 = vpack.c.b16 %v1050, %v1047
    %v1162 = vpack.c.b16 %v1051, %v1048
    %v1163 = vpack.c.b16 %v1055, %v1052
    %v1164 = vpack.c.b16 %v1056, %v1053
    %v1165 = vpack.c.b16 %v1057, %v1054
    %v1166 = vpack.c.b16 %v1061, %v1058
    %v1167 = vpack.c.b16 %v1062, %v1059
    %v1168 = vpack.c.b16 %v1063, %v1060
    %v1169 = vpack.c.b16 %v1067, %v1064
    %v1170 = vpack.c.b16 %v1068, %v1065
    %v1171 = vpack.c.b16 %v1069, %v1066
    %v1172 = vpack.c.b16 %v1073, %v1070
    %v1173 = vpack.c.b16 %v1074, %v1071
    %v1174 = vpack.c.b16 %v1075, %v1072
    %v1175 = vpack.c.b16 %v1079, %v1076
    %v1176 = vpack.c.b16 %v1080, %v1077
    %v1177 = vpack.c.b16 %v1081, %v1078
    %v1178 = vpack.c.b16 %v1085, %v1082
    %v1179 = vpack.c.b16 %v1086, %v1083
    %v1180 = vpack.c.b16 %v1087, %v1084
    %v1181 = vpack.c.b16 %v1091, %v1088
    %v1182 = vpack.c.b16 %v1092, %v1089
    %v1183 = vpack.c.b16 %v1093, %v1090
    %v1184 = vpack.c.b16 %v1097, %v1094
    %v1185 = vpack.c.b16 %v1098, %v1095
    %v1186 = vpack.c.b16 %v1099, %v1096
    %v1187 = vpack.c.b16 %v1103, %v1100
    %v1188 = vpack.c.b16 %v1104, %v1101
    %v1189 = vpack.c.b16 %v1105, %v1102
    %v1190 = vpack.c.b16 %v1109, %v1106
    %v1191 = vpack.c.b16 %v1110, %v1107
    %v1192 = vpack.c.b16 %v1111, %v1108
    %v1193 = vpack.c.b16 %v1115, %v1112
    %v1194 = vpack.c.b16 %v1116, %v1113
    %v1195 = vpack.c.b16 %v1117, %v1114
    %v1196 = vpack.c.b16 %v1121, %v1118
    %v1197 = vpack.c.b16 %v1122, %v1119
    %v1198 = vpack.c.b16 %v1123, %v1120
    %v1199 = vpack.c.b16 %v1127, %v1124
    %v1200 = vpack.c.b16 %v1128, %v1125
    %v1201 = vpack.c.b16 %v1129, %v1126
    %1274 = vmatpush.bf16.msra.mxu0 %v1151
    %1275 = vmatpush.bf16.msra.mxu0 %v1148
    %1276 = vmatpush.bf16.msra.mxu0 %v1145
    %1277 = vmatpush.bf16.msra.mxu0 %v1142
    %1278 = vmatpush.bf16.msra.mxu0 %v1139
    %1279 = vmatpush.bf16.msra.mxu0 %v1136
    %1280 = vmatpush.bf16.msra.mxu0 %v1133
    %1281 = vmatpush.bf16.msra.mxu0 %v1130
    %1282 = vmatmul.bf16.gmra.mxu0 %v783
    %v1283 = vpop.f32.mrf.mxu0
    %v1284 = vadd.f32 %v884, %v1283
    %v1285 = vpop.f32.mrf.mxu0
    %1286 = vdwg.mxu0
    %1287 = vmatpush.bf16.msra.mxu0 %v1175
    %1288 = vmatpush.bf16.msra.mxu0 %v1172
    %1289 = vmatpush.bf16.msra.mxu0 %v1169
    %1290 = vmatpush.bf16.msra.mxu0 %v1166
    %1291 = vmatpush.bf16.msra.mxu0 %v1163
    %1292 = vmatpush.bf16.msra.mxu0 %v1160
    %1293 = vmatpush.bf16.msra.mxu0 %v1157
    %1294 = vmatpush.bf16.msra.mxu0 %v1154
    %1295 = vmatmul.bf16.gmra.mxu0 %v784
    %v1296 = vpop.f32.mrf.mxu0
    %v1297 = vadd.f32 %v1284, %v1296
    %v1298 = vpop.f32.mrf.mxu0
    %1299 = vdwg.mxu0
    %1300 = vmatpush.bf16.msra.mxu0 %v1199
    %1301 = vmatpush.bf16.msra.mxu0 %v1196
    %1302 = vmatpush.bf16.msra.mxu0 %v1193
    %1303 = vmatpush.bf16.msra.mxu0 %v1190
    %1304 = vmatpush.bf16.msra.mxu0 %v1187
    %1305 = vmatpush.bf16.msra.mxu0 %v1184
    %1306 = vmatpush.bf16.msra.mxu0 %v1181
    %1307 = vmatpush.bf16.msra.mxu0 %v1178
    %1308 = vmatmul.bf16.gmra.mxu0 %v785
    %v1309 = vpop.f32.mrf.mxu0
    %v1310 = vadd.f32 %v1297, %v1309
    %v1311 = vpop.f32.mrf.mxu0
    %1312 = vdwg.mxu0
    %1313 = vmatpush.bf16.msra.mxu0 %v1152
    %1314 = vmatpush.bf16.msra.mxu0 %v1149
    %1315 = vmatpush.bf16.msra.mxu0 %v1146
    %1316 = vmatpush.bf16.msra.mxu0 %v1143
    %1317 = vmatpush.bf16.msra.mxu0 %v1140
    %1318 = vmatpush.bf16.msra.mxu0 %v1137
    %1319 = vmatpush.bf16.msra.mxu0 %v1134
    %1320 = vmatpush.bf16.msra.mxu0 %v1131
    %1321 = vmatmul.bf16.gmra.mxu0 %v783
    %v1322 = vpop.f32.mrf.mxu0
    %v1323 = vadd.f32 %v885, %v1322
    %v1324 = vpop.f32.mrf.mxu0
    %1325 = vdwg.mxu0
    %1326 = vmatpush.bf16.msra.mxu0 %v1176
    %1327 = vmatpush.bf16.msra.mxu0 %v1173
    %1328 = vmatpush.bf16.msra.mxu0 %v1170
    %1329 = vmatpush.bf16.msra.mxu0 %v1167
    %1330 = vmatpush.bf16.msra.mxu0 %v1164
    %1331 = vmatpush.bf16.msra.mxu0 %v1161
    %1332 = vmatpush.bf16.msra.mxu0 %v1158
    %1333 = vmatpush.bf16.msra.mxu0 %v1155
    %1334 = vmatmul.bf16.gmra.mxu0 %v784
    %v1335 = vpop.f32.mrf.mxu0
    %v1336 = vadd.f32 %v1323, %v1335
    %v1337 = vpop.f32.mrf.mxu0
    %1338 = vdwg.mxu0
    %1339 = vmatpush.bf16.msra.mxu0 %v1200
    %1340 = vmatpush.bf16.msra.mxu0 %v1197
    %1341 = vmatpush.bf16.msra.mxu0 %v1194
    %1342 = vmatpush.bf16.msra.mxu0 %v1191
    %1343 = vmatpush.bf16.msra.mxu0 %v1188
    %1344 = vmatpush.bf16.msra.mxu0 %v1185
    %1345 = vmatpush.bf16.msra.mxu0 %v1182
    %1346 = vmatpush.bf16.msra.mxu0 %v1179
    %1347 = vmatmul.bf16.gmra.mxu0 %v785
    %v1348 = vpop.f32.mrf.mxu0
    %v1349 = vadd.f32 %v1336, %v1348
    %v1350 = vpop.f32.mrf.mxu0
    %1351 = vdwg.mxu0
    %1352 = vmatpush.bf16.msra.mxu0 %v1153
    %1353 = vmatpush.bf16.msra.mxu0 %v1150
    %1354 = vmatpush.bf16.msra.mxu0 %v1147
    %1355 = vmatpush.bf16.msra.mxu0 %v1144
    %1356 = vmatpush.bf16.msra.mxu0 %v1141
    %1357 = vmatpush.bf16.msra.mxu0 %v1138
    %1358 = vmatpush.bf16.msra.mxu0 %v1135
    %1359 = vmatpush.bf16.msra.mxu0 %v1132
    %1360 = vmatmul.bf16.gmra.mxu0 %v783
    %v1361 = vpop.f32.mrf.mxu0
    %v1362 = vadd.f32 %v886, %v1361
    %v1363 = vpop.f32.mrf.mxu0
    %1364 = vdwg.mxu0
    %1365 = vmatpush.bf16.msra.mxu0 %v1177
    %1366 = vmatpush.bf16.msra.mxu0 %v1174
    %1367 = vmatpush.bf16.msra.mxu0 %v1171
    %1368 = vmatpush.bf16.msra.mxu0 %v1168
    %1369 = vmatpush.bf16.msra.mxu0 %v1165
    %1370 = vmatpush.bf16.msra.mxu0 %v1162
    %1371 = vmatpush.bf16.msra.mxu0 %v1159
    %1372 = vmatpush.bf16.msra.mxu0 %v1156
    %1373 = vmatmul.bf16.gmra.mxu0 %v784
    %v1374 = vpop.f32.mrf.mxu0
    %v1375 = vadd.f32 %v1362, %v1374
    %v1376 = vpop.f32.mrf.mxu0
    %1377 = vdwg.mxu0
    %1378 = vmatpush.bf16.msra.mxu0 %v1201
    %1379 = vmatpush.bf16.msra.mxu0 %v1198
    %1380 = vmatpush.bf16.msra.mxu0 %v1195
    %1381 = vmatpush.bf16.msra.mxu0 %v1192
    %1382 = vmatpush.bf16.msra.mxu0 %v1189
    %1383 = vmatpush.bf16.msra.mxu0 %v1186
    %1384 = vmatpush.bf16.msra.mxu0 %v1183
    %1385 = vmatpush.bf16.msra.mxu0 %v1180
    %1386 = vmatmul.bf16.gmra.mxu0 %v785
    %v1387 = vpop.f32.mrf.mxu0
    %v1388 = vadd.f32 %v1375, %v1387
    %v1389 = vpop.f32.mrf.mxu0
    %1390 = vdwg.mxu0
    %v1391 = vmax.f32 %v1310, 0.0
    %v1392 = vmax.f32 %v1349, 0.0
    %v1393 = vmax.f32 %v1388, 0.0
    %v1394 = vpack.c.bf16 %v1391, %v1391
    %v1395 = vpack.c.bf16 %v1392, %v1392
    %v1396 = vpack.c.bf16 %v1393, %v1393
    %v1397 = vld [vmem:[#allocation7] sm:$0xf]
    %v1398 = vld [vmem:[#allocation7 + $0x4] sm:$0xf]
    %v1399 = vld [vmem:[#allocation7 + $0x8] sm:$0xf]
    %v1400 = vld [vmem:[#allocation7 + $0xc] sm:$0xf]
    %v1401 = vld [vmem:[#allocation7 + $0x10] sm:$0xf]
    %v1402 = vld [vmem:[#allocation7 + $0x14] sm:$0xf]
    %v1403 = vld [vmem:[#allocation7 + $0x18] sm:$0xf]
    %v1404 = vld [vmem:[#allocation7 + $0x1c] sm:$0xf]
    %v1405 = vld [vmem:[#allocation7 + $0x20] sm:$0xf]
    %v1406 = vld [vmem:[#allocation7 + $0x24] sm:$0xf]
    %v1407 = vld [vmem:[#allocation7 + $0x28] sm:$0xf]
    %v1408 = vld [vmem:[#allocation7 + $0x2c] sm:$0xf]
    %v1409 = vld [vmem:[#allocation7 + $0x30] sm:$0xf]
    %v1410 = vld [vmem:[#allocation7 + $0x34] sm:$0xf]
    %v1411 = vld [vmem:[#allocation7 + $0x38] sm:$0xf]
    %v1412 = vld [vmem:[#allocation7 + $0x3c] sm:$0xf]
    %v1413 = vld [vmem:[#allocation7 + $0x40] sm:$0xf]
    %v1414 = vld [vmem:[#allocation7 + $0x44] sm:$0xf]
    %v1415 = vld [vmem:[#allocation7 + $0x48] sm:$0xf]
    %v1416 = vld [vmem:[#allocation7 + $0x4c] sm:$0xf]
    %v1417 = vld [vmem:[#allocation7 + $0x50] sm:$0xf]
    %v1418 = vld [vmem:[#allocation7 + $0x54] sm:$0xf]
    %v1419 = vld [vmem:[#allocation7 + $0x58] sm:$0xf]
    %v1420 = vld [vmem:[#allocation7 + $0x5c] sm:$0xf]
    %v1421 = vld [vmem:[#allocation7 + $0x60] sm:$0xf]
    %v1422 = vld [vmem:[#allocation7 + $0x64] sm:$0xf]
    %v1423 = vld [vmem:[#allocation7 + $0x68] sm:$0xf]
    %v1424 = vld [vmem:[#allocation7 + $0x6c] sm:$0xf]
    %v1425 = vld [vmem:[#allocation7 + $0x70] sm:$0xf]
    %v1426 = vld [vmem:[#allocation7 + $0x74] sm:$0xf]
    %v1427 = vld [vmem:[#allocation7 + $0x78] sm:$0xf]
    %v1428 = vld [vmem:[#allocation7 + $0x7c] sm:$0xf]
    %v1429 = vld [vmem:[#allocation7 + $0x80] sm:$0xf]
    %v1430 = vld [vmem:[#allocation7 + $0x84] sm:$0xf]
    %v1431 = vld [vmem:[#allocation7 + $0x88] sm:$0xf]
    %v1432 = vld [vmem:[#allocation7 + $0x8c] sm:$0xf]
    %v1433 = vld [vmem:[#allocation7 + $0x90] sm:$0xf]
    %v1434 = vld [vmem:[#allocation7 + $0x94] sm:$0xf]
    %v1435 = vld [vmem:[#allocation7 + $0x98] sm:$0xf]
    %v1436 = vld [vmem:[#allocation7 + $0x9c] sm:$0xf]
    %v1437 = vld [vmem:[#allocation7 + $0xa0] sm:$0xf]
    %v1438 = vld [vmem:[#allocation7 + $0xa4] sm:$0xf]
    %v1439 = vld [vmem:[#allocation7 + $0xa8] sm:$0xf]
    %v1440 = vld [vmem:[#allocation7 + $0xac] sm:$0xf]
    %v1441 = vld [vmem:[#allocation7 + $0xb0] sm:$0xf]
    %v1442 = vld [vmem:[#allocation7 + $0xb4] sm:$0xf]
    %v1443 = vld [vmem:[#allocation7 + $0xb8] sm:$0xf]
    %v1444 = vld [vmem:[#allocation7 + $0xbc] sm:$0xf]
    %v1445 = vld [vmem:[%s8] sm:$0x1]
    %v1447 = vperm.slane %v1445, 0
    %v1497 = vunpack.c.l.b16 %v1397
    %v1498 = vunpack.c.l.b16 %v1398
    %v1499 = vunpack.c.l.b16 %v1399
    %v1500 = vunpack.c.l.b16 %v1400
    %v1501 = vunpack.c.l.b16 %v1401
    %v1502 = vunpack.c.l.b16 %v1402
    %v1503 = vunpack.c.l.b16 %v1403
    %v1504 = vunpack.c.l.b16 %v1404
    %v1505 = vunpack.c.l.b16 %v1405
    %v1506 = vunpack.c.l.b16 %v1406
    %v1507 = vunpack.c.l.b16 %v1407
    %v1508 = vunpack.c.l.b16 %v1408
    %v1509 = vunpack.c.l.b16 %v1409
    %v1510 = vunpack.c.l.b16 %v1410
    %v1511 = vunpack.c.l.b16 %v1411
    %v1512 = vunpack.c.l.b16 %v1412
    %v1513 = vunpack.c.l.b16 %v1413
    %v1514 = vunpack.c.l.b16 %v1414
    %v1515 = vunpack.c.l.b16 %v1415
    %v1516 = vunpack.c.l.b16 %v1416
    %v1517 = vunpack.c.l.b16 %v1417
    %v1518 = vunpack.c.l.b16 %v1418
    %v1519 = vunpack.c.l.b16 %v1419
    %v1520 = vunpack.c.l.b16 %v1420
    %v1521 = vunpack.c.l.b16 %v1421
    %v1522 = vunpack.c.l.b16 %v1422
    %v1523 = vunpack.c.l.b16 %v1423
    %v1524 = vunpack.c.l.b16 %v1424
    %v1525 = vunpack.c.l.b16 %v1425
    %v1526 = vunpack.c.l.b16 %v1426
    %v1527 = vunpack.c.l.b16 %v1427
    %v1528 = vunpack.c.l.b16 %v1428
    %v1529 = vunpack.c.l.b16 %v1429
    %v1530 = vunpack.c.l.b16 %v1430
    %v1531 = vunpack.c.l.b16 %v1431
    %v1532 = vunpack.c.l.b16 %v1432
    %v1533 = vunpack.c.l.b16 %v1433
    %v1534 = vunpack.c.l.b16 %v1434
    %v1535 = vunpack.c.l.b16 %v1435
    %v1536 = vunpack.c.l.b16 %v1436
    %v1537 = vunpack.c.l.b16 %v1437
    %v1538 = vunpack.c.l.b16 %v1438
    %v1539 = vunpack.c.l.b16 %v1439
    %v1540 = vunpack.c.l.b16 %v1440
    %v1541 = vunpack.c.l.b16 %v1441
    %v1542 = vunpack.c.l.b16 %v1442
    %v1543 = vunpack.c.l.b16 %v1443
    %v1544 = vunpack.c.l.b16 %v1444
    %v1545 = vpack.c.b16 %v1498, %v1497
    %v1546 = vpack.c.b16 %v1500, %v1499
    %v1547 = vpack.c.b16 %v1502, %v1501
    %v1548 = vpack.c.b16 %v1504, %v1503
    %v1549 = vpack.c.b16 %v1506, %v1505
    %v1550 = vpack.c.b16 %v1508, %v1507
    %v1551 = vpack.c.b16 %v1510, %v1509
    %v1552 = vpack.c.b16 %v1512, %v1511
    %v1553 = vpack.c.b16 %v1514, %v1513
    %v1554 = vpack.c.b16 %v1516, %v1515
    %v1555 = vpack.c.b16 %v1518, %v1517
    %v1556 = vpack.c.b16 %v1520, %v1519
    %v1557 = vpack.c.b16 %v1522, %v1521
    %v1558 = vpack.c.b16 %v1524, %v1523
    %v1559 = vpack.c.b16 %v1526, %v1525
    %v1560 = vpack.c.b16 %v1528, %v1527
    %v1561 = vpack.c.b16 %v1530, %v1529
    %v1562 = vpack.c.b16 %v1532, %v1531
    %v1563 = vpack.c.b16 %v1534, %v1533
    %v1564 = vpack.c.b16 %v1536, %v1535
    %v1565 = vpack.c.b16 %v1538, %v1537
    %v1566 = vpack.c.b16 %v1540, %v1539
    %v1567 = vpack.c.b16 %v1542, %v1541
    %v1568 = vpack.c.b16 %v1544, %v1543
    %1593 = vmatpush.bf16.msra.mxu0 %v1552
    %1594 = vmatpush.bf16.msra.mxu0 %v1551
    %1595 = vmatpush.bf16.msra.mxu0 %v1550
    %1596 = vmatpush.bf16.msra.mxu0 %v1549
    %1597 = vmatpush.bf16.msra.mxu0 %v1548
    %1598 = vmatpush.bf16.msra.mxu0 %v1547
    %1599 = vmatpush.bf16.msra.mxu0 %v1546
    %1600 = vmatpush.bf16.msra.mxu0 %v1545
    %1601 = vmatmul.bf16.gmra.mxu0 %v1394
    %v1602 = vpop.f32.mrf.mxu0
    %v1603 = vadd.f32 %v1447, %v1602
    %v1604 = vpop.f32.mrf.mxu0
    %1605 = vdwg.mxu0
    %1606 = vmatpush.bf16.msra.mxu0 %v1560
    %1607 = vmatpush.bf16.msra.mxu0 %v1559
    %1608 = vmatpush.bf16.msra.mxu0 %v1558
    %1609 = vmatpush.bf16.msra.mxu0 %v1557
    %1610 = vmatpush.bf16.msra.mxu0 %v1556
    %1611 = vmatpush.bf16.msra.mxu0 %v1555
    %1612 = vmatpush.bf16.msra.mxu0 %v1554
    %1613 = vmatpush.bf16.msra.mxu0 %v1553
    %1614 = vmatmul.bf16.gmra.mxu0 %v1395
    %v1615 = vpop.f32.mrf.mxu0
    %v1616 = vadd.f32 %v1603, %v1615
    %v1617 = vpop.f32.mrf.mxu0
    %1618 = vdwg.mxu0
    %1619 = vmatpush.bf16.msra.mxu0 %v1568
    %1620 = vmatpush.bf16.msra.mxu0 %v1567
    %1621 = vmatpush.bf16.msra.mxu0 %v1566
    %1622 = vmatpush.bf16.msra.mxu0 %v1565
    %1623 = vmatpush.bf16.msra.mxu0 %v1564
    %1624 = vmatpush.bf16.msra.mxu0 %v1563
    %1625 = vmatpush.bf16.msra.mxu0 %v1562
    %1626 = vmatpush.bf16.msra.mxu0 %v1561
    %1627 = vmatmul.bf16.gmra.mxu0 %v1396
    %v1628 = vpop.f32.mrf.mxu0
    %v1629 = vadd.f32 %v1616, %v1628
    %v1630 = vpop.f32.mrf.mxu0
    %1631 = vdwg.mxu0
    %1632 = vst [vmem:[%s9] sm:$0xff] %v1629
    // Predicated region
    $region54: #{mlp_forward.1} parent=1 // pred_check
      _
    $region55: #{mlp_forward.1} parent=1 // pred_check_branch
      %1634 = sbr.rel (0) target = $region57
    $region56: #{mlp_forward.1} parent=1 // pred_region
      _
    $region57: #{mlp_forward.1} parent=1 // pred_fallthru
      _
    // Predicated region
    $region58: #{mlp_forward.1} parent=1 // pred_check
      _
    $region59: #{mlp_forward.1} parent=1 // pred_check_branch
      %1636 = sbr.rel (0) target = $region61
    $region60: #{mlp_forward.1} parent=1 // pred_region
      _
    $region61: #{mlp_forward.1} parent=1 // pred_fallthru
      _
    %1637 = vsyncpa [#allocation3], 1
    %1638 = vsyncpa [#allocation5], 1
    %1639 = vsyncpa [#allocation8], 1

</llo_original>
